<compile_context>
chip_gen: v5e
topology: v5e:2x2
jax: 0.10.0
libtpu: 0.0.40
codegen_flags: <defaults>
</compile_context>

<pallas_src>
import functools
import random

import jax
import jax.numpy as jnp
from jax.experimental import pallas as pl
from jax.experimental.pallas import tpu as pltpu

_MXU_DTYPE = jnp.bfloat16   # pixels in [0,255]; 2-tap weights near-exact in bf16
_LANE = 128
_SUBLANE = 8


def _round_up(x: int, m: int) -> int:
    return ((x + m - 1) // m) * m


@functools.lru_cache(maxsize=1)
def _tpu_generation() -> int:
    try:
        kind = jax.devices()[0].device_kind.lower()
    except Exception:
        return 6
    for g in (7, 6, 5, 4, 3):
        if f"v{g}" in kind:
            return g
    return 6


def _vmem_budget(gen: int, raw_bytes: int) -> int:
    cap = (56 << 20) if gen >= 7 else (100 << 20)
    want = int(raw_bytes * 1.6) + (4 << 20)
    return int(min(cap, max(32 << 20, want)))


@functools.lru_cache(maxsize=1)
def _buffered_one_supported() -> bool:
    """Probe whether pipeline_mode=pl.Buffered(1) works on this jax/libtpu."""
    try:
        def _probe(a_ref, b_ref, o_ref):
            o_ref[...] = a_ref[...] + b_ref[...]
        a = jnp.ones((16, 128), jnp.float32)
        b = jnp.ones((8, 128), jnp.float32)
        out = pl.pallas_call(
            _probe,
            out_shape=jax.ShapeDtypeStruct((16, 128), jnp.float32),
            grid=(2,),
            in_specs=[
                pl.BlockSpec((8, 128), lambda i: (i, 0)),
                pl.BlockSpec((8, 128), lambda i: (0, 0),
                             pipeline_mode=pl.Buffered(1)),
            ],
            out_specs=pl.BlockSpec((8, 128), lambda i: (i, 0)),
        )(a, b)
        return bool(jax.device_get(jnp.all(out == 2.0)))
    except Exception:
        return False


# --------------------------------------------------------------------------
# Kernel 1: bounding box of all pixels != 255 (row-blocked running reduction)
# --------------------------------------------------------------------------
def _bbox_kernel(img_ref, out_ref, colmin_ref):
    i = pl.program_id(0)
    blk = img_ref[...]                                  # (tb, W) f32
    tb, w = blk.shape
    big = jnp.int32(2 ** 30)

    @pl.when(i == 0)
    def _():
        out_ref[0] = big                                # running top
        out_ref[2] = jnp.int32(-1)                      # running bottom
        colmin_ref[...] = jnp.full(colmin_ref.shape, 255.0, colmin_ref.dtype)

    row_min = jnp.min(blk, axis=1, keepdims=True)       # (tb, 1) lane reduce
    row_any = row_min < 255.0
    rows = jax.lax.broadcasted_iota(jnp.int32, (tb, 1), 0) + i * tb
    out_ref[0] = jnp.minimum(out_ref[0], jnp.min(jnp.where(row_any, rows, big)))
    out_ref[2] = jnp.maximum(out_ref[2], jnp.max(jnp.where(row_any, rows, -1)))
    colmin_ref[...] = jnp.minimum(colmin_ref[...],
                                  jnp.min(blk, axis=0, keepdims=True))

    @pl.when(i == pl.num_programs(0) - 1)
    def _():
        cols = jax.lax.broadcasted_iota(jnp.int32, (1, w), 1)
        col_any = colmin_ref[...] < 255.0
        out_ref[1] = jnp.min(jnp.where(col_any, cols, big))     # left
        out_ref[3] = jnp.max(jnp.where(col_any, cols, -1))      # right


def _bbox_impl(img, *, tb, h_pad, vmem_limit):
    h, w = img.shape[1], img.shape[2]
    padded = jnp.pad(img[0], ((0, h_pad - h), (0, 0)), constant_values=255.0)
    return pl.pallas_call(
        _bbox_kernel,
        out_shape=jax.ShapeDtypeStruct((4,), jnp.int32),
        grid=(h_pad // tb,),
        in_specs=[pl.BlockSpec((tb, w), lambda i: (i, 0))],
        out_specs=pl.BlockSpec(memory_space=pltpu.MemorySpace.SMEM),
        scratch_shapes=[pltpu.VMEM((1, w), jnp.float32)],
        compiler_params=pltpu.CompilerParams(
            dimension_semantics=("arbitrary",),
            vmem_limit_bytes=vmem_limit),
    )(padded)


@functools.lru_cache(maxsize=None)
def _get_bbox_fn(h, w):
    gen = _tpu_generation()
    h8 = _round_up(h, _SUBLANE)
    if h8 <= 512:
        tb, h_pad = h8, h8
    else:
        tb = 256
        h_pad = _round_up(h, tb)
    vmem_limit = _vmem_budget(gen, 2 * tb * w * 4 + w * 4)
    return jax.jit(functools.partial(_bbox_impl, tb=tb, h_pad=h_pad,
                                     vmem_limit=vmem_limit))


# --------------------------------------------------------------------------
# Kernel 2: fused crop + pad(bg) + bilinear resize as two MXU matmuls
#           out = Wy @ (band - bg) @ WxT + bg, K-banded over input rows
# --------------------------------------------------------------------------
def _resample_kernel(simg_ref, wy_ref, wxt_ref, out_ref, acc_ref, *, bg):
    k = pl.program_id(1)

    @pl.when(k == 0)
    def _():
        acc_ref[...] = jnp.zeros_like(acc_ref)

    acc_ref[...] += jnp.dot(wy_ref[...], simg_ref[...],
                            preferred_element_type=jnp.float32)

    @pl.when(k == pl.num_programs(1) - 1)
    def _():
        out = jnp.dot(acc_ref[...].astype(wxt_ref.dtype), wxt_ref[...],
                      preferred_element_type=jnp.float32) + bg
        out_ref[...] = jnp.clip(out, 0.0, 255.0)


def _interp_weights(shape, axis_out, n_out, n_src, n_content, offset):
    """Bilinear (align_corners=False, no antialias) weight matrix.

    shape[axis_out] indexes output pixels; the other axis indexes physical band
    rows/cols.  Taps land at `offset + i{0,1}` (crop fold); taps beyond the
    content extent are dropped, which together with out = W @ (band - bg) @ W'
    + bg is exactly a bilinear resize of the band right/bottom-padded with `bg`
    up to n_src (pad fold).  Output rows >= n_out (lane/sublane padding) are
    all-zero and therefore produce bg.
    """
    o = jax.lax.broadcasted_iota(jnp.float32, shape, axis_out)
    j = jax.lax.broadcasted_iota(jnp.float32, shape, 1 - axis_out)
    scale = n_src / jnp.maximum(n_out, 1.0)
    hi = jnp.maximum(n_src - 1.0, 0.0)
    src = jnp.clip((o + 0.5) * scale - 0.5, 0.0, hi)
    i0 = jnp.floor(src)
    frac = src - i0
    i1 = jnp.minimum(i0 + 1.0, hi)
    w = (jnp.where(j == offset + i0, 1.0 - frac, 0.0)
         + jnp.where(j == offset + i1, frac, 0.0))
    w = jnp.where((o < n_out) & (j < offset + n_content), w, 0.0)
    return w.astype(_MXU_DTYPE)


def _resample_impl(band, params, *, in_h_pad, in_w_pad, out_h_pad, out_w_pad,
                   th, tk, bg, single_buf, vmem_limit):
    band_h, band_w = band.shape
    # Hoisted shift+cast: bg is host-known; zero-padding in shifted space is
    # exactly bg-padding of the image.  Done once per call, not per grid step.
    shifted = (band - bg).astype(_MXU_DTYPE)
    shifted = jnp.pad(shifted, ((0, in_h_pad - band_h), (0, in_w_pad - band_w)))

    p = params.astype(jnp.float32)   # [top_off, left_off, src_h, src_w,
                                     #  cont_h, cont_w, out_h, out_w]
    wy = _interp_weights((out_h_pad, in_h_pad), 0, p[6], p[2], p[4], p[0])
    wxt = _interp_weights((in_w_pad, out_w_pad), 1, p[7], p[3], p[5], p[1])

    n_k = in_h_pad // tk

    def spec(shape, index_map, single):
        if single:
            return pl.BlockSpec(shape, index_map, pipeline_mode=pl.Buffered(1))
        return pl.BlockSpec(shape, index_map)

    out2d = pl.pallas_call(
        functools.partial(_resample_kernel, bg=float(bg)),
        out_shape=jax.ShapeDtypeStruct((out_h_pad, out_w_pad), jnp.float32),
        grid=(out_h_pad // th, n_k),
        in_specs=[
            spec((tk, in_w_pad), lambda i, k: (k, 0),
                 single_buf and n_k == 1),                      # image band
            spec((th, tk), lambda i, k: (i, k), False),         # wy block
            spec((in_w_pad, out_w_pad), lambda i, k: (0, 0),
                 single_buf),                                   # wxt (invariant)
        ],
        out_specs=pl.BlockSpec((th, out_w_pad), lambda i, k: (i, 0)),
        scratch_shapes=[pltpu.VMEM((th, in_w_pad), jnp.float32)],
        compiler_params=pltpu.CompilerParams(
            dimension_semantics=("parallel", "arbitrary"),
            vmem_limit_bytes=vmem_limit),
    )(shifted, wy, wxt)
    return out2d[None]


@functools.lru_cache(maxsize=None)
def _get_resample_fn(in_h_pad, in_w_pad, out_h_pad, out_w_pad, th, tk, bg,
                     single_buf, vmem_limit):
    return jax.jit(functools.partial(
        _resample_impl, in_h_pad=in_h_pad, in_w_pad=in_w_pad,
        out_h_pad=out_h_pad, out_w_pad=out_w_pad, th=th, tk=tk,
        bg=bg, single_buf=single_buf, vmem_limit=vmem_limit))


def resample(img, *, top, left, src, content, out, bg):
    """Fused crop + pad(bg) + bilinear resize (align_corners=False).

    Returns a lane/sublane-padded canvas (1, out_h_pad, out_w_pad); the logical
    (out[0], out[1]) region holds the result, the remainder holds `bg`.
    """
    _, H, W = img.shape
    gen = _tpu_generation()
    top, left = int(top), int(left)
    cont_h, cont_w = int(content[0]), int(content[1])
    out_h, out_w = int(out[0]), int(out[1])

    # Host-side aligned crop to the content band (bbox offsets are host ints).
    t0 = (top // _SUBLANE) * _SUBLANE
    l0 = (left // _LANE) * _LANE
    t1 = max(min(_round_up(top + cont_h, _SUBLANE), H), t0 + 1)
    l1 = max(min(_round_up(left + cont_w, _LANE), W), l0 + 1)
    band = img[0, t0:t1, l0:l1]
    band_h, band_w = t1 - t0, l1 - l0

    # Output tiling: never let the H block collapse below the MXU depth.
    th_target = 128 if gen <= 5 else 256
    out_h_pad = _round_up(max(out_h, 1), _SUBLANE)
    if out_h_pad > th_target:
        out_h_pad = _round_up(out_h_pad, th_target)
        th = th_target
    else:
        th = out_h_pad
    out_w_pad = _round_up(max(out_w, 1), _LANE)
    if gen >= 6 and out_w_pad > _LANE:
        out_w_pad = _round_up(out_w_pad, 256)       # fill the 256-wide MXU N dim

    # Contraction tiling: K-band large bands so per-step VMEM stays bounded.
    in_w_pad = _round_up(band_w, _LANE)
    in_h_pad = _round_up(band_h, 16)                # bf16 sublane pack
    resident_cap = (16 << 20) if gen == 6 else (8 << 20)
    if in_h_pad * in_w_pad * 2 > resident_cap:
        tk = 256 if gen >= 7 else 512
        in_h_pad = _round_up(band_h, tk)
    else:
        tk = in_h_pad

    single_buf = _buffered_one_supported()

    # Explicit scoped-VMEM budget from the actual buffer sizes (with headroom).
    n_k = in_h_pad // tk
    simg_bufs = 1 if (single_buf and n_k == 1) else 2
    wxt_bufs = 1 if single_buf else 2
    raw = (tk * in_w_pad * 2 * simg_bufs          # shifted image block(s)
           + th * tk * 2 * 2                      # wy blocks (double buffered)
           + in_w_pad * out_w_pad * 2 * wxt_bufs  # wxt
           + th * out_w_pad * 4 * 2               # output blocks
           + th * in_w_pad * 4)                   # f32 accumulator scratch
    vmem_limit = _vmem_budget(gen, raw)

    fn = _get_resample_fn(in_h_pad, in_w_pad, out_h_pad, out_w_pad,
                          th, tk, float(bg), single_buf, vmem_limit)
    params = jnp.asarray(
        [top - t0, left - l0, int(src[0]), int(src[1]),
         cont_h, cont_w, out_h, out_w], dtype=jnp.int32)
    return fn(band, params)


# --------------------------------------------------------------------------
# Module port: identical control flow to the PyTorch PadMaxResize
# --------------------------------------------------------------------------
class PadMaxResize:
    __max_iter__ = 10

    def __init__(self, min_size, max_size):
        self.min_size = min_size
        self.max_size = max_size

    def is_img_valid(self, img):
        _, h, w = img.shape
        return self._is_valid(h, w)

    def _is_valid(self, h, w):
        return (self.min_size[0] <= h <= self.max_size[0]
                and self.min_size[1] <= w <= self.max_size[1])

    # --- crop_bbox: single unavoidable 4-int32 readback -------------------
    def crop_bbox_coords(self, img):
        _, H, W = img.shape
        fn = _get_bbox_fn(int(H), int(W))
        t, l, b, r = (int(v) for v in jax.device_get(fn(img)))
        if b < t or r < l:
            # TODO(synk): all-background image; torch's .min() on an empty
            # tensor would raise — fall back to the full frame instead.
            t, l, b, r = 0, 0, H - 1, W - 1
        return t, l, b - t + 1, r - l + 1

    # --- random_resize ratio (host RNG, like the original) ----------------
    def random_resize_size(self, ch, cw):
        ratio = random.randint(5, 20) / 10
        return int(ch * ratio), int(cw * ratio)

    # --- one while-loop step: pad(255) + resize fused in one kernel -------
    def pad_resize(self, canvas, h, w):
        mxh, mxw = self.max_size
        mnh, mnw = self.min_size
        ratio_h = h / mxh if h > mxh else (-1 if h < mnh else 1)
        ratio_w = w / mxw if w > mxw else (-1 if w < mnw else 1)
        if ratio_h == 1 and ratio_w == 1:
            return canvas, h, w
        ph = mnh - h if ratio_h == -1 else 0
        pw = mnw - w if ratio_w == -1 else 0
        src_h, src_w = h + ph, w + pw            # size after fill=255 padding
        if ratio_h > 1 or ratio_w > 1:
            ratio = max(ratio_h, ratio_w)
            out_h, out_w = int(src_h / ratio), int(src_w / ratio)
        else:
            out_h, out_w = src_h, src_w          # pad-only (identity weights)
        bg = 255 if (ph > 0 or pw > 0) else 0
        canvas = resample(canvas, top=0, left=0, src=(src_h, src_w),
                          content=(h, w), out=(out_h, out_w), bg=bg)
        return canvas, out_h, out_w

    # --- forward ----------------------------------------------------------
    def forward(self, img):
        img = jnp.asarray(img)
        if img.ndim == 2:
            img = img[None]
        if img.shape[0] != 1:
            # PIL 'L' round-trip of the original: channel 0 -> uint8 -> f32
            img = img[0].astype(jnp.uint8).astype(jnp.float32)[None]
        if img.dtype != jnp.float32:
            img = img.astype(jnp.float32)

        top, left, ch, cw = self.crop_bbox_coords(img)
        out_h, out_w = self.random_resize_size(ch, cw)
        # crop + random bilinear resize fused into ONE pallas_call
        canvas = resample(img, top=top, left=left, src=(ch, cw),
                          content=(ch, cw), out=(out_h, out_w), bg=0)
        h, w = out_h, out_w
        # TODO(synk): save_img (matplotlib PNG file write) has no Pallas
        #             equivalent; skipped.
        it = 0
        while not self._is_valid(h, w) and it < self.__max_iter__:
            canvas, h, w = self.pad_resize(canvas, h, w)
            it += 1
        assert it < self.__max_iter__, \
            f'pad_resize match the maximum iter, img size: (1, {h}, {w})'
        return canvas[:, :h, :w]


# --------------------------------------------------------------------------
# Pure-JAX reference bilinear (align_corners=False) for value checks
# --------------------------------------------------------------------------
def _ref_bilinear(img2d, out_h, out_w):
    in_h, in_w = img2d.shape

    def coords(n_out, n_in):
        o = jnp.arange(n_out, dtype=jnp.float32)
        s = jnp.clip((o + 0.5) * (n_in / n_out) - 0.5, 0.0, n_in - 1.0)
        i0 = jnp.floor(s)
        f = s - i0
        i1 = jnp.minimum(i0 + 1.0, n_in - 1.0)
        return i0.astype(jnp.int32), i1.astype(jnp.int32), f

    r0, r1, fr = coords(out_h, in_h)
    c0, c1, fc = coords(out_w, in_w)
    top = img2d[r0][:, c0] * (1 - fc)[None, :] + img2d[r0][:, c1] * fc[None, :]
    bot = img2d[r1][:, c0] * (1 - fc)[None, :] + img2d[r1][:, c1] * fc[None, :]
    return top * (1 - fr)[:, None] + bot * fr[:, None]


# --------------------------------------------------------------------------
if __name__ == "__main__":
    random.seed(0)                     # deterministic "random_resize" ratios
    key = jax.random.PRNGKey(0)

    # small grayscale image: 255 background with a 10x10 block of content
    H, W = 16, 16
    img = jnp.full((1, H, W), 255.0, dtype=jnp.float32)
    content = jnp.round(jax.random.uniform(key, (10, 10), minval=0.0,
                                           maxval=200.0, dtype=jnp.float32))
    img = img.at[0, 3:13, 4:14].set(content)

    # --- direct resample checks against a pure-JAX reference -------------
    # 1) crop(3,4,10,10) + bilinear upscale to (23,17)
    up = resample(img, top=3, left=4, src=(10, 10), content=(10, 10),
                  out=(23, 17), bg=0)
    ref_up = _ref_bilinear(img[0, 3:13, 4:14], 23, 17)
    err_up = float(jnp.max(jnp.abs(up[0, :23, :17] - ref_up)))
    assert err_up <= 8.0, f"resample(up) error too large: {err_up}"

    # 2) pad-with-255 (fold) + identity resize: should match exact padding
    pad = resample(img, top=0, left=0, src=(20, 24), content=(16, 16),
                   out=(20, 24), bg=255)
    ref_pad = jnp.pad(img[0], ((0, 4), (0, 8)), constant_values=255.0)
    err_pad = float(jnp.max(jnp.abs(pad[0, :20, :24] - ref_pad)))
    assert err_pad <= 0.5, f"resample(pad) error too large: {err_pad}"

    # --- full module forward, two configs ---------------------------------
    # Config A: typical square bounds (may exercise the pad-only path)
    tf_a = PadMaxResize(min_size=(10, 10), max_size=(20, 20))
    out_a = jax.block_until_ready(tf_a.forward(img))
    assert out_a.ndim == 3 and out_a.shape[0] == 1
    assert tf_a.is_img_valid(out_a)

    # Config B: rectangular bounds — exercises fused pad(255)+downscale path
    tf_b = PadMaxResize(min_size=(24, 4), max_size=(48, 8))
    out_b = jax.block_until_ready(tf_b.forward(img))
    assert out_b.ndim == 3 and out_b.shape[0] == 1
    assert tf_b.is_img_valid(out_b)

    # value sanity (outputs are clamped bilinear combos of [0, 255] pixels)
    assert float(jnp.min(out_a)) >= 0.0 and float(jnp.max(out_a)) <= 255.0
    assert float(jnp.min(out_b)) >= 0.0 and float(jnp.max(out_b)) <= 255.0

    print("KERNEL_OK")
</pallas_src>

<mosaic_0001>
module attributes {stable_mosaic.version = 11 : i64} {
  func.func @_probe(%arg0: i32, %arg1: memref<8x128xf32, #tpu.memory_space<vmem>>, %arg2: memref<8x128xf32, #tpu.memory_space<vmem>>, %arg3: memref<8x128xf32, #tpu.memory_space<vmem>>) attributes {dimension_semantics = [#tpu.dimension_semantics<arbitrary>], iteration_bounds = array<i64: 2>, scalar_prefetch = 0 : i64, scratch_operands = 0 : i64, tpu.core_type = #tpu.core_type<tc>, window_params = [{transform_indices = @transform_0, window_bounds = array<i64: 8, 128>}, {pipeline_mode = #tpu.pipeline_mode<synchronous>, transform_indices = @transform_1, window_bounds = array<i64: 8, 128>}, {transform_indices = @transform_2, window_bounds = array<i64: 8, 128>}]} {
    %c0 = arith.constant 0 : index
    %c0_0 = arith.constant 0 : index
    %0 = vector.load %arg1[%c0, %c0_0] : memref<8x128xf32, #tpu.memory_space<vmem>>, vector<8x128xf32>
    %c0_1 = arith.constant 0 : index
    %c0_2 = arith.constant 0 : index
    %1 = vector.load %arg2[%c0_1, %c0_2] : memref<8x128xf32, #tpu.memory_space<vmem>>, vector<8x128xf32>
    %2 = arith.addf %0, %1 : vector<8x128xf32>
    %c0_3 = arith.constant 0 : index
    %c0_4 = arith.constant 0 : index
    %3 = vector.load %arg3[%c0_3, %c0_4] : memref<8x128xf32, #tpu.memory_space<vmem>>, vector<8x128xf32>
    tpu.vector_store %arg3[%c0_3, %c0_4], %2 {strides = array<i32>} : memref<8x128xf32, #tpu.memory_space<vmem>>, vector<8x128xf32>,
    return
  }
  func.func @transform_0(%arg0: i32) -> (i32, i32) {
    %c0_i32 = arith.constant 0 : i32
    %c0_i32_0 = arith.constant 0 : i32
    return %arg0, %c0_i32 : i32, i32
  }
  func.func @transform_1(%arg0: i32) -> (i32, i32) {
    %c0_i32 = arith.constant 0 : i32
    %c0_i32_0 = arith.constant 0 : i32
    %c0_i32_1 = arith.constant 0 : i32
    return %c0_i32, %c0_i32_0 : i32, i32
  }
  func.func @transform_2(%arg0: i32) -> (i32, i32) {
    %c0_i32 = arith.constant 0 : i32
    %c0_i32_0 = arith.constant 0 : i32
    return %arg0, %c0_i32 : i32, i32
  }
}

module attributes {stable_mosaic.version = 11 : i64} {
  func.func @_resample_kernel(%arg0: i32, %arg1: i32, %arg2: memref<16x128xbf16, #tpu.memory_space<vmem>>, %arg3: memref<24x16xbf16, #tpu.memory_space<vmem>>, %arg4: memref<128x128xbf16, #tpu.memory_space<vmem>>, %arg5: memref<24x128xf32, #tpu.memory_space<vmem>>, %arg6: memref<24x128xf32, #tpu.memory_space<vmem>>) attributes {dimension_semantics = [#tpu.dimension_semantics<parallel>, #tpu.dimension_semantics<arbitrary>], iteration_bounds = array<i64: 1, 1>, scalar_prefetch = 0 : i64, scratch_operands = 1 : i64, tpu.core_type = #tpu.core_type<tc>, window_params = [{transform_indices = @transform_0, window_bounds = array<i64: 16, 128>}, {transform_indices = @transform_1, window_bounds = array<i64: 24, 16>}, {pipeline_mode = #tpu.pipeline_mode<synchronous>, transform_indices = @transform_2, window_bounds = array<i64: 128, 128>}, {transform_indices = @transform_3, window_bounds = array<i64: 24, 128>}]} {
    %c0_i32 = arith.constant 0 : i32
    %0 = arith.cmpi eq, %arg1, %c0_i32 : i32
    %1 = arith.extui %0 : i1 to i32
    %c0_i32_0 = arith.constant 0 : i32
    %2 = arith.cmpi ne, %1, %c0_i32_0 : i32
    scf.if %2 {
      %cst_10 = arith.constant 0.000000e+00 : f32
      %12 = vector.broadcast %cst_10 : f32 to vector<24x128xf32>
      %c0_11 = arith.constant 0 : index
      %c0_12 = arith.constant 0 : index
      %13 = vector.load %arg6[%c0_11, %c0_12] : memref<24x128xf32, #tpu.memory_space<vmem>>, vector<24x128xf32>
      tpu.vector_store %arg6[%c0_11, %c0_12], %12 {strides = array<i32>} : memref<24x128xf32, #tpu.memory_space<vmem>>, vector<24x128xf32>,
    } else {
    }
    %c0 = arith.constant 0 : index
    %c0_1 = arith.constant 0 : index
    %3 = vector.load %arg6[%c0, %c0_1] : memref<24x128xf32, #tpu.memory_space<vmem>>, vector<24x128xf32>
    %c0_2 = arith.constant 0 : index
    %c0_3 = arith.constant 0 : index
    %4 = vector.load %arg3[%c0_2, %c0_3] : memref<24x16xbf16, #tpu.memory_space<vmem>>, vector<24x16xbf16>
    %c0_4 = arith.constant 0 : index
    %c0_5 = arith.constant 0 : index
    %5 = vector.load %arg2[%c0_4, %c0_5] : memref<16x128xbf16, #tpu.memory_space<vmem>>, vector<16x128xbf16>
    %cst = arith.constant dense<0.000000e+00> : vector<24x128xf32>
    %6 = tpu.matmul %4, %5, %cst {dimension_numbers = #tpu.dot_dimension_numbers<[1], [0], [0], [1], [0, 0, 1, 1], [], []>} : vector<24x16xbf16>, vector<16x128xbf16>, vector<24x128xf32> -> vector<24x128xf32>
    %7 = arith.addf %3, %6 : vector<24x128xf32>
    %c0_6 = arith.constant 0 : index
    %c0_7 = arith.constant 0 : index
    %8 = vector.load %arg6[%c0_6, %c0_7] : memref<24x128xf32, #tpu.memory_space<vmem>>, vector<24x128xf32>
    tpu.vector_store %arg6[%c0_6, %c0_7], %7 {strides = array<i32>} : memref<24x128xf32, #tpu.memory_space<vmem>>, vector<24x128xf32>,
    %c0_i32_8 = arith.constant 0 : i32
    %9 = arith.cmpi eq, %arg1, %c0_i32_8 : i32
    %10 = arith.extui %9 : i1 to i32
    %c0_i32_9 = arith.constant 0 : i32
    %11 = arith.cmpi ne, %10, %c0_i32_9 : i32
    scf.if %11 {
      %c0_10 = arith.constant 0 : index
      %c0_11 = arith.constant 0 : index
      %12 = vector.load %arg6[%c0_10, %c0_11] : memref<24x128xf32, #tpu.memory_space<vmem>>, vector<24x128xf32>
      %13 = arith.truncf %12 : vector<24x128xf32> to vector<24x128xbf16>
      %c0_12 = arith.constant 0 : index
      %c0_13 = arith.constant 0 : index
      %14 = vector.load %arg4[%c0_12, %c0_13] : memref<128x128xbf16, #tpu.memory_space<vmem>>, vector<128x128xbf16>
      %cst_14 = arith.constant dense<0.000000e+00> : vector<24x128xf32>
      %15 = tpu.matmul %13, %14, %cst_14 {dimension_numbers = #tpu.dot_dimension_numbers<[1], [0], [0], [1], [0, 0, 1, 1], [], []>} : vector<24x128xbf16>, vector<128x128xbf16>, vector<24x128xf32> -> vector<24x128xf32>
      %cst_15 = arith.constant 0.000000e+00 : f32
      %16 = vector.broadcast %cst_15 : f32 to vector<24x128xf32>
      %17 = arith.addf %15, %16 : vector<24x128xf32>
      %cst_16 = arith.constant 0.000000e+00 : f32
      %cst_17 = arith.constant 2.550000e+02 : f32
      %18 = vector.broadcast %cst_16 : f32 to vector<24x128xf32>
      %19 = arith.maximumf %18, %17 : vector<24x128xf32>
      %20 = vector.broadcast %cst_17 : f32 to vector<24x128xf32>
      %21 = arith.minimumf %20, %19 : vector<24x128xf32>
      %c0_18 = arith.constant 0 : index
      %c0_19 = arith.constant 0 : index
      %22 = vector.load %arg5[%c0_18, %c0_19] : memref<24x128xf32, #tpu.memory_space<vmem>>, vector<24x128xf32>
      tpu.vector_store %arg5[%c0_18, %c0_19], %21 {strides = array<i32>} : memref<24x128xf32, #tpu.memory_space<vmem>>, vector<24x128xf32>,
    } else {
    }
    return
  }
  func.func @transform_0(%arg0: i32, %arg1: i32) -> (i32, i32) {
    %c0_i32 = arith.constant 0 : i32
    %c0_i32_0 = arith.constant 0 : i32
    return %arg1, %c0_i32 : i32, i32
  }
  func.func @transform_1(%arg0: i32, %arg1: i32) -> (i32, i32) {
    %c0_i32 = arith.constant 0 : i32
    return %arg0, %arg1 : i32, i32
  }
  func.func @transform_2(%arg0: i32, %arg1: i32) -> (i32, i32) {
    %c0_i32 = arith.constant 0 : i32
    %c0_i32_0 = arith.constant 0 : i32
    %c0_i32_1 = arith.constant 0 : i32
    return %c0_i32, %c0_i32_0 : i32, i32
  }
  func.func @transform_3(%arg0: i32, %arg1: i32) -> (i32, i32) {
    %c0_i32 = arith.constant 0 : i32
    %c0_i32_0 = arith.constant 0 : i32
    return %arg0, %c0_i32 : i32, i32
  }
}

</mosaic_0001>

<llo_original>
// kernel: tpu_custom_call.1
$region0: #{tpu_custom_call.1}
  #allocation0 [shape = 'u32[]', space=smem, size = 0x4, offset = 0x4, fixed_abs, tag = 'smem constant byte address 0x4 - core index']
  #allocation1 [shape = 'u32[72,128]{1,0:T(1,128)}', space=vmem, size = 0x9000, scoped, tag = 'internal scratch']
  %s0 = inlined_call_operand.hbm [shape: f32[16,128], index: 0, kind: input, shape index: {}]
  %s1 = inlined_call_operand.hbm [shape: f32[8,128], index: 1, kind: input, shape index: {}]
  %s2 = inlined_call_operand.hbm [shape: f32[16,128], index: 2, kind: output, shape index: {}]
  %s3 = sld [smem:[#allocation0]]
  $region49: #{tpu_custom_call.1} parent=0
    _
  %s5 = ssub.s32 1, %s3
  %s6 = scalar_select 0, %s5, %s3
  $region1: #{tpu_custom_call.1} parent=0
    #allocation2 [shape = 'u8[8192]{0}', space=vmem, size = 0x2000, scoped, tag = 'input window, operand 0']
    #allocation3 [shape = 's32[2]{0}', space=sflag, size = 0x8, scoped, tag = 'scoped memory for tpu_custom_call.1']
    #allocation4 [shape = 's32[2]{0}', space=sflag, size = 0x8, scoped, tag = 'scoped memory for tpu_custom_call.1']
    #allocation5 [shape = 'u8[4096]{0}', space=vmem, size = 0x1000, scoped, tag = 'input window, operand 1, single buffered']
    #allocation6 [shape = 's32[1]{0}', space=sflag, size = 0x4, scoped, tag = 'scoped memory for tpu_custom_call.1']
    #allocation7 [shape = 'u8[8192]{0}', space=vmem, size = 0x2000, scoped, tag = 'output window, operand 0']
    %7 = vsyncpa [#allocation3], 0
    %s8 = scalar_lea.sflag [#allocation3], 1
    %9 = vsyncpa %s8, 0
    %10 = vsyncpa [#allocation6], 0
    %11 = vsyncpa [#allocation4], 0
    %s12 = scalar_lea.sflag [#allocation4], 1
    %13 = vsyncpa %s12, 0
    loop: start=0, step=1, limit=4
    $region2: #{tpu_custom_call.1} parent=1 // loop_pre_header
      _
    $region3: #{tpu_custom_call.1} parent=1 // loop_header
      %s15 = sphi 0, %s19
      %p16 = scmp.ge.s32.totalorder %s15, 4
      %s25 = sphi 0, %s27
      %s28 = sphi 0, %s25
      %s29 = sphi 0, %s28
      %s45 = sphi 0, %s29
      %s49 = sphi 0, %s49
      %s51 = sphi 0, %s49
      %s52 = sphi 0, %s51
      %s66 = sphi 0, %s52
      %s72 = sphi 0, %s74
      %s75 = sphi 0, %s72
      %s76 = sphi 0, %s75
      %s92 = sphi 0, %s76
    $region4: #{tpu_custom_call.1} parent=1 // loop_header_branch
      %18 = sbr.rel (%p16) target = $region8
    $region5: #{tpu_custom_call.1} parent=1 // loop_body
      %s20 = ssub.s32 %s15, 1
      %s21 = ssub.s32 %s15, 2
      %s22 = sadd.s32 %s15, 1
      %s23 = ssub.s32 %s15, %s22
      %p24 = scmp.eq.s32.totalorder %s23, 0
      %s26 = sadd.s32 %s25, 1
      %s27 = scalar_select %p24, %s25, %s26
      %p30 = pneg %p24
      %p31 = scmp.eq.s32.totalorder %s15, 1
      %p32 = por %p30, %p31
      %p33 = scmp.ne.s32.totalorder %s25, %s28
      %p34 = scmp.eq.s32.totalorder %s15, 0
      %p35 = por %p33, %p34
      %p36 = scmp.ne.s32.totalorder %s25, %s28
      %p37 = scmp.eq.s32.totalorder %s20, 1
      %p38 = por %p36, %p37
      %p39 = scmp.ne.s32.totalorder %s28, %s29
      %p40 = scmp.eq.s32.totalorder %s20, 0
      %p41 = por %p39, %p40
      %p42 = scmp.ne.s32.totalorder %s28, %s29
      %p43 = scmp.eq.s32.totalorder %s21, 1
      %p44 = por %p42, %p43
      %p46 = scmp.ne.s32.totalorder %s29, %s45
      %p47 = scmp.eq.s32.totalorder %s21, 0
      %p48 = por %p46, %p47
      %s50 = sadd.s32 %s49, 1
      %p53 = scmp.eq.s32.totalorder %s15, 1
      %p54 = scmp.ne.s32.totalorder %s49, %s51
      %p55 = scmp.eq.s32.totalorder %s15, 0
      %p56 = por %p54, %p55
      %p57 = scmp.ne.s32.totalorder %s49, %s51
      %p58 = scmp.eq.s32.totalorder %s20, 1
      %p59 = por %p57, %p58
      %p60 = scmp.ne.s32.totalorder %s51, %s52
      %p61 = scmp.eq.s32.totalorder %s20, 0
      %p62 = por %p60, %p61
      %p63 = scmp.ne.s32.totalorder %s51, %s52
      %p64 = scmp.eq.s32.totalorder %s21, 1
      %p65 = por %p63, %p64
      %p67 = scmp.ne.s32.totalorder %s52, %s66
      %p68 = scmp.eq.s32.totalorder %s21, 0
      %p69 = por %p67, %p68
      %s70 = ssub.s32 %s15, %s22
      %p71 = scmp.eq.s32.totalorder %s70, 0
      %s73 = sadd.s32 %s72, 1
      %s74 = scalar_select %p71, %s72, %s73
      %p77 = pneg %p71
      %p78 = scmp.eq.s32.totalorder %s15, 1
      %p79 = por %p77, %p78
      %p80 = scmp.ne.s32.totalorder %s72, %s75
      %p81 = scmp.eq.s32.totalorder %s15, 0
      %p82 = por %p80, %p81
      %p83 = scmp.ne.s32.totalorder %s72, %s75
      %p84 = scmp.eq.s32.totalorder %s20, 1
      %p85 = por %p83, %p84
      %p86 = scmp.ne.s32.totalorder %s75, %s76
      %p87 = scmp.eq.s32.totalorder %s20, 0
      %p88 = por %p86, %p87
      %p89 = scmp.ne.s32.totalorder %s75, %s76
      %p90 = scmp.eq.s32.totalorder %s21, 1
      %p91 = por %p89, %p90
      %p93 = scmp.ne.s32.totalorder %s76, %s92
      %p94 = scmp.eq.s32.totalorder %s21, 0
      %p95 = por %p93, %p94
      %p96 = scmp.le.s32.totalorder 1, %s15
      %p97 = scmp.lt.s32.totalorder %s15, 3
      %p98 = pnand %p96, %p97
      %p99 = pneg %p98
      // Predicated region
      $region9: #{tpu_custom_call.1} parent=5 // pred_check
        _
      $region10: #{tpu_custom_call.1} parent=5 // pred_check_branch
        %101 = sbr.rel (%p98) target = $region12
      $region11: #{tpu_custom_call.1} parent=5 // pred_region
        %s102 = ssub.s32 %s15, 1
        // Predicated region
        $region13: #{tpu_custom_call.1} parent=11 // pred_check
          %p103 = pneg %p62
        $region14: #{tpu_custom_call.1} parent=11 // pred_check_branch
          %105 = sbr.rel (%p103) target = $region16
        $region15: #{tpu_custom_call.1} parent=11 // pred_region
          %107 = vsyncadd [#allocation6], 0
          %s109 = sshll.u32 %s1, 4
          %s110 = int_to_ptr.hbm [resolvable:$true] %s109
          %s111 = sshll.u32 [#allocation5], 4
          %s112 = int_to_ptr.vmem [resolvable:$true] %s111
          %114 = dma.hbm_to_vmem [thread:$0]  %s110, 128, %s112, [#allocation6]
        $region16: #{tpu_custom_call.1} parent=11 // pred_fallthru
          _
      $region12: #{tpu_custom_call.1} parent=5 // pred_fallthru
        _
      %p115 = scmp.lt.s32.totalorder %s15, 2
      // Predicated region
      $region17: #{tpu_custom_call.1} parent=5 // pred_check
        %p116 = pneg %p115
      $region18: #{tpu_custom_call.1} parent=5 // pred_check_branch
        %118 = sbr.rel (%p116) target = $region20
      $region19: #{tpu_custom_call.1} parent=5 // pred_region
        // Predicated region
        $region21: #{tpu_custom_call.1} parent=19 // pred_check
          %p119 = pneg %p35
        $region22: #{tpu_custom_call.1} parent=19 // pred_check_branch
          %121 = sbr.rel (%p119) target = $region24
        $region23: #{tpu_custom_call.1} parent=19 // pred_region
          %s122 = sand.u32 %s25, 1
          %s123 = scalar_lea.sflag [#allocation3], %s122
          %s124 = sand.u32 %s25, 1
          %s125 = smul.addr %s124, 8
          %s126 = scalar_lea.vmem [#allocation2], %s125
          %128 = vsyncadd %s123, 0
          %s129 = smul.addr %s15, 8
          %s130 = scalar_lea.hbm %s0, %s129
          %s132 = sshll.u32 %s130, 4
          %s133 = int_to_ptr.hbm [resolvable:$true] %s132
          %s134 = sshll.u32 %s126, 4
          %s135 = int_to_ptr.vmem [resolvable:$true] %s134
          %137 = dma.hbm_to_vmem [thread:$0]  %s133, 128, %s135, %s123
        $region24: #{tpu_custom_call.1} parent=19 // pred_fallthru
          _
      $region20: #{tpu_custom_call.1} parent=5 // pred_fallthru
        _
      %p138 = scmp.le.s32.totalorder 1, %s15
      %p139 = scmp.lt.s32.totalorder %s15, 3
      %p140 = pnand %p138, %p139
      %p141 = pneg %p140
      // Predicated region
      $region25: #{tpu_custom_call.1} parent=5 // pred_check
        _
      $region26: #{tpu_custom_call.1} parent=5 // pred_check_branch
        %143 = sbr.rel (%p140) target = $region28
      $region27: #{tpu_custom_call.1} parent=5 // pred_region
        %s144 = ssub.s32 %s15, 1
        %s145 = sand.u32 %s28, 1
        %s146 = scalar_lea.sflag [#allocation3], %s145
        %s147 = sand.u32 %s28, 1
        %s148 = smul.addr %s147, 8
        %s149 = scalar_lea.vmem [#allocation2], %s148
        // Predicated region
        $region29: #{tpu_custom_call.1} parent=27 // pred_check
          %p150 = pneg %p41
        $region30: #{tpu_custom_call.1} parent=27 // pred_check_branch
          %152 = sbr.rel (%p150) target = $region32
        $region31: #{tpu_custom_call.1} parent=27 // pred_region
          %154 = dma.done %s146, 128
        $region32: #{tpu_custom_call.1} parent=27 // pred_fallthru
          _
        // Predicated region
        $region33: #{tpu_custom_call.1} parent=27 // pred_check
          %p155 = pneg %p62
        $region34: #{tpu_custom_call.1} parent=27 // pred_check_branch
          %157 = sbr.rel (%p155) target = $region36
        $region35: #{tpu_custom_call.1} parent=27 // pred_region
          %159 = dma.done [#allocation6], 128
        $region36: #{tpu_custom_call.1} parent=27 // pred_fallthru
          _
        %s160 = sand.u32 %s28, 1
        %s161 = scalar_lea.sflag [#allocation3], %s160
        %s162 = sand.u32 %s28, 1
        %s163 = smul.addr %s162, 8
        %s164 = scalar_lea.vmem [#allocation2], %s163
        %p165 = pneg %p41
        %p166 = pneg %p38
        %p167 = pneg %p62
        %p168 = pneg %p59
        %p169 = pneg %p88
        %p170 = pneg %p85
        %s171 = sand.u32 %s75, 1
        %s172 = scalar_lea.sflag [#allocation4], %s171
        %s173 = sand.u32 %s75, 1
        %s174 = smul.addr %s173, 8
        %s175 = scalar_lea.vmem [#allocation7], %s174
        %v176 = vld [vmem:[%s149] sm:$0xff]
        %v177 = vld [vmem:[#allocation5] sm:$0xff]
        %v178 = vadd.f32 %v176, %v177
        %179 = vst [vmem:[%s175] sm:$0xff] %v178
        %s180 = sand.u32 %s75, 1
        %s181 = scalar_lea.sflag [#allocation4], %s180
        %s182 = sand.u32 %s75, 1
        %s183 = smul.addr %s182, 8
        %s184 = scalar_lea.vmem [#allocation7], %s183
        // Predicated region
        $region37: #{tpu_custom_call.1} parent=27 // pred_check
          %p185 = pneg %p85
        $region38: #{tpu_custom_call.1} parent=27 // pred_check_branch
          %187 = sbr.rel (%p185) target = $region40
        $region39: #{tpu_custom_call.1} parent=27 // pred_region
          %189 = vsyncadd %s181, 0
          %s190 = smul.addr %s20, 8
          %s191 = scalar_lea.hbm %s2, %s190
          %s193 = sshll.u32 %s184, 4
          %s194 = int_to_ptr.vmem [resolvable:$true] %s193
          %s195 = sshll.u32 %s191, 4
          %s196 = int_to_ptr.hbm [resolvable:$true] %s195
          %198 = dma.vmem_to_hbm [thread:$0]  %s194, 128, %s196, %s181
        $region40: #{tpu_custom_call.1} parent=27 // pred_fallthru
          _
      $region28: #{tpu_custom_call.1} parent=5 // pred_fallthru
        _
      %p199 = scmp.le.s32.totalorder 2, %s15
      // Predicated region
      $region41: #{tpu_custom_call.1} parent=5 // pred_check
        %p200 = pneg %p199
      $region42: #{tpu_custom_call.1} parent=5 // pred_check_branch
        %202 = sbr.rel (%p200) target = $region44
      $region43: #{tpu_custom_call.1} parent=5 // pred_region
        %s203 = ssub.s32 %s15, 2
        // Predicated region
        $region45: #{tpu_custom_call.1} parent=43 // pred_check
          %p204 = pneg %p91
        $region46: #{tpu_custom_call.1} parent=43 // pred_check_branch
          %206 = sbr.rel (%p204) target = $region48
        $region47: #{tpu_custom_call.1} parent=43 // pred_region
          %s207 = sand.u32 %s76, 1
          %s208 = scalar_lea.sflag [#allocation4], %s207
          %s209 = sand.u32 %s76, 1
          %s210 = smul.addr %s209, 8
          %s211 = scalar_lea.vmem [#allocation7], %s210
          %213 = dma.done %s208, 128
        $region48: #{tpu_custom_call.1} parent=43 // pred_fallthru
          _
      $region44: #{tpu_custom_call.1} parent=5 // pred_fallthru
        _
    $region6: #{tpu_custom_call.1} parent=1 // loop_footer
      %s19 = sadd.s32 1, %s15
    $region7: #{tpu_custom_call.1} parent=1 // loop_footer_branch
      %14 = sbr.rel target = $region3
    $region8: #{tpu_custom_call.1} parent=1 // loop_exit
      _
    %214 = vsyncpa [#allocation3], 1
    %s215 = scalar_lea.sflag [#allocation3], 1
    %216 = vsyncpa %s215, 1
    %217 = vsyncpa [#allocation6], 1
    %218 = vsyncpa [#allocation4], 1
    %s219 = scalar_lea.sflag [#allocation4], 1
    %220 = vsyncpa %s219, 1

// kernel: _resample_impl.1
$region0: #{_resample_impl.1}
  #allocation0 [shape = 'u32[]', space=smem, size = 0x4, offset = 0x4, fixed_abs, tag = 'smem constant byte address 0x4 - core index']
  #allocation1 [shape = 'u32[72,128]{1,0:T(1,128)}', space=vmem, size = 0x9000, scoped, tag = 'internal scratch']
  #allocation2 [shape = 'f32[24,128]{1,0:T(8,128)}', space=vmem, size = 0x3000, scoped, tag = 'scratch operand']
  %s0 = inlined_call_operand.vmem [shape: bf16[16,128], index: 0, kind: input, shape index: {}]
  %s1 = inlined_call_operand.vmem [shape: bf16[24,16], index: 1, kind: input, shape index: {}]
  %s2 = inlined_call_operand.vmem [shape: bf16[128,128], index: 2, kind: input, shape index: {}]
  %s3 = inlined_call_operand.hbm [shape: f32[24,128], index: 3, kind: output, shape index: {}]
  %s4 = sld [smem:[#allocation0]]
  $region30: #{_resample_impl.1} parent=0
    _
  %s6 = ssub.s32 1, %s4
  %s7 = scalar_select 0, %s6, %s4
  $region1: #{_resample_impl.1} parent=0
    #allocation3 [shape = 'u8[12288]{0}', space=vmem, size = 0x3000, scoped, tag = 'output window, operand 0, single buffered']
    #allocation4 [shape = 's32[1]{0}', space=sflag, size = 0x4, scoped, tag = 'scoped memory for _resample_impl.1']
    %8 = vsyncpa [#allocation4], 0
    // Predicated region
    $region2: #{_resample_impl.1} parent=1 // pred_check
      _
    $region3: #{_resample_impl.1} parent=1 // pred_check_branch
      %10 = sbr.rel (0) target = $region5
    $region4: #{_resample_impl.1} parent=1 // pred_region
      _
    $region5: #{_resample_impl.1} parent=1 // pred_fallthru
      _
    // Predicated region
    $region6: #{_resample_impl.1} parent=1 // pred_check
      _
    $region7: #{_resample_impl.1} parent=1 // pred_check_branch
      %12 = sbr.rel (0) target = $region9
    $region8: #{_resample_impl.1} parent=1 // pred_region
      _
    $region9: #{_resample_impl.1} parent=1 // pred_fallthru
      _
    // Predicated region
    $region10: #{_resample_impl.1} parent=1 // pred_check
      _
    $region11: #{_resample_impl.1} parent=1 // pred_check_branch
      %14 = sbr.rel (0) target = $region13
    $region12: #{_resample_impl.1} parent=1 // pred_region
      _
    $region13: #{_resample_impl.1} parent=1 // pred_fallthru
      _
    %p16 = scmp.eq.s32.totalorder 0, 0
    // Predicated region
    $region14: #{_resample_impl.1} parent=1 // pred_check
      %p17 = pneg %p16
    $region15: #{_resample_impl.1} parent=1 // pred_check_branch
      %19 = sbr.rel (%p17) target = $region17
    $region16: #{_resample_impl.1} parent=1 // pred_region
      %20 = vst [vmem:[#allocation2] sm:$0xff] 0.0
      %21 = vst [vmem:[#allocation2 + $0x8] sm:$0xff] 0.0
      %22 = vst [vmem:[#allocation2 + $0x10] sm:$0xff] 0.0
    $region17: #{_resample_impl.1} parent=1 // pred_fallthru
      _
    %v23 = vld [vmem:[#allocation2] sm:$0xff]
    %v24 = vld [vmem:[#allocation2 + $0x8] sm:$0xff]
    %v25 = vld [vmem:[#allocation2 + $0x10] sm:$0xff]
    %v26 = vld [vmem:[%s1] sm:$0xf]
    %v27 = vld [vmem:[%s1 + $0x4] sm:$0xf]
    %v28 = vld [vmem:[%s1 + $0x8] sm:$0xf]
    %v29 = vld [vmem:[%s0] sm:$0xf]
    %v30 = vld [vmem:[%s0 + $0x4] sm:$0xf]
    %v34 = vunpack.c.l.b16 %v26
    %v35 = vunpack.c.l.b16 %v27
    %v36 = vunpack.c.l.b16 %v28
    %v37 = vpack.c.b16 %v35, %v34
    %v38 = vpack.c.b16 %v36, %v36
    %v41 = vunpack.c.l.b16 %v29
    %v42 = vunpack.c.l.b16 %v30
    %v43 = vpack.c.b16 %v42, %v41
    %vm45 = vcmask 130048
    %v47 = vsel %vm45, %v37, 0
    %v50 = vsel %vm45, %v38, 0
    %52 = vmatpush.bf16.msra.mxu0 0
    %53 = vmatpush.bf16.msra.mxu0 0
    %54 = vmatpush.bf16.msra.mxu0 0
    %55 = vmatpush.bf16.msra.mxu0 0
    %56 = vmatpush.bf16.msra.mxu0 0
    %57 = vmatpush.bf16.msra.mxu0 0
    %58 = vmatpush.bf16.msra.mxu0 0
    %59 = vmatpush.bf16.msra.mxu0 %v43
    %60 = vmatmul.bf16.gmra.mxu0 %v47
    %v61 = vpop.f32.mrf.mxu0
    %v62 = vadd.f32 0.0, %v61
    %v63 = vpop.f32.mrf.mxu0
    %v64 = vadd.f32 0.0, %v63
    %65 = vmatmul.bf16.gmra.mxu0 %v50
    %v66 = vpop.f32.mrf.mxu0
    %v67 = vadd.f32 0.0, %v66
    %v68 = vpop.f32.mrf.mxu0
    %69 = vdwg.mxu0
    %v70 = vadd.f32 %v23, %v62
    %v71 = vadd.f32 %v24, %v64
    %v72 = vadd.f32 %v25, %v67
    %73 = vst [vmem:[#allocation2] sm:$0xff] %v70
    %74 = vst [vmem:[#allocation2 + $0x8] sm:$0xff] %v71
    %75 = vst [vmem:[#allocation2 + $0x10] sm:$0xff] %v72
    // Predicated region
    $region18: #{_resample_impl.1} parent=1 // pred_check
      %p76 = pneg %p16
    $region19: #{_resample_impl.1} parent=1 // pred_check_branch
      %78 = sbr.rel (%p76) target = $region21
    $region20: #{_resample_impl.1} parent=1 // pred_region
      %v79 = vld [vmem:[#allocation2] sm:$0xff]
      %v80 = vld [vmem:[#allocation2 + $0x8] sm:$0xff]
      %v81 = vld [vmem:[#allocation2 + $0x10] sm:$0xff]
      %v82 = vpack.c.bf16 %v80, %v79
      %v83 = vpack.c.bf16 %v81, %v81
      %v84 = vld [vmem:[%s2] sm:$0xf]
      %v85 = vld [vmem:[%s2 + $0x4] sm:$0xf]
      %v86 = vld [vmem:[%s2 + $0x8] sm:$0xf]
      %v87 = vld [vmem:[%s2 + $0xc] sm:$0xf]
      %v88 = vld [vmem:[%s2 + $0x10] sm:$0xf]
      %v89 = vld [vmem:[%s2 + $0x14] sm:$0xf]
      %v90 = vld [vmem:[%s2 + $0x18] sm:$0xf]
      %v91 = vld [vmem:[%s2 + $0x1c] sm:$0xf]
      %v92 = vld [vmem:[%s2 + $0x20] sm:$0xf]
      %v93 = vld [vmem:[%s2 + $0x24] sm:$0xf]
      %v94 = vld [vmem:[%s2 + $0x28] sm:$0xf]
      %v95 = vld [vmem:[%s2 + $0x2c] sm:$0xf]
      %v96 = vld [vmem:[%s2 + $0x30] sm:$0xf]
      %v97 = vld [vmem:[%s2 + $0x34] sm:$0xf]
      %v98 = vld [vmem:[%s2 + $0x38] sm:$0xf]
      %v99 = vld [vmem:[%s2 + $0x3c] sm:$0xf]
      %v116 = vunpack.c.l.b16 %v84
      %v117 = vunpack.c.l.b16 %v85
      %v118 = vunpack.c.l.b16 %v86
      %v119 = vunpack.c.l.b16 %v87
      %v120 = vunpack.c.l.b16 %v88
      %v121 = vunpack.c.l.b16 %v89
      %v122 = vunpack.c.l.b16 %v90
      %v123 = vunpack.c.l.b16 %v91
      %v124 = vunpack.c.l.b16 %v92
      %v125 = vunpack.c.l.b16 %v93
      %v126 = vunpack.c.l.b16 %v94
      %v127 = vunpack.c.l.b16 %v95
      %v128 = vunpack.c.l.b16 %v96
      %v129 = vunpack.c.l.b16 %v97
      %v130 = vunpack.c.l.b16 %v98
      %v131 = vunpack.c.l.b16 %v99
      %v132 = vpack.c.b16 %v117, %v116
      %v133 = vpack.c.b16 %v119, %v118
      %v134 = vpack.c.b16 %v121, %v120
      %v135 = vpack.c.b16 %v123, %v122
      %v136 = vpack.c.b16 %v125, %v124
      %v137 = vpack.c.b16 %v127, %v126
      %v138 = vpack.c.b16 %v129, %v128
      %v139 = vpack.c.b16 %v131, %v130
      %148 = vmatpush.bf16.msra.mxu0 %v139
      %149 = vmatpush.bf16.msra.mxu0 %v138
      %150 = vmatpush.bf16.msra.mxu0 %v137
      %151 = vmatpush.bf16.msra.mxu0 %v136
      %152 = vmatpush.bf16.msra.mxu0 %v135
      %153 = vmatpush.bf16.msra.mxu0 %v134
      %154 = vmatpush.bf16.msra.mxu0 %v133
      %155 = vmatpush.bf16.msra.mxu0 %v132
      %156 = vmatmul.bf16.gmra.mxu0 %v82
      %v157 = vpop.f32.mrf.mxu0
      %v158 = vadd.f32 0.0, %v157
      %v159 = vpop.f32.mrf.mxu0
      %v160 = vadd.f32 0.0, %v159
      %161 = vmatmul.bf16.gmra.mxu0 %v83
      %v162 = vpop.f32.mrf.mxu0
      %v163 = vadd.f32 0.0, %v162
      %v164 = vpop.f32.mrf.mxu0
      %165 = vdwg.mxu0
      %v166 = vmax.f32 %v158, 0.0
      %v167 = vmax.f32 %v160, 0.0
      %v168 = vmax.f32 %v163, 0.0
      %v169 = vmin.f32 %v166, 255.0
      %v170 = vmin.f32 %v167, 255.0
      %v171 = vmin.f32 %v168, 255.0
      %172 = vst [vmem:[#allocation3] sm:$0xff] %v169
      %173 = vst [vmem:[#allocation3 + $0x8] sm:$0xff] %v170
      %174 = vst [vmem:[#allocation3 + $0x10] sm:$0xff] %v171
    $region21: #{_resample_impl.1} parent=1 // pred_fallthru
      _
    // Predicated region
    $region22: #{_resample_impl.1} parent=1 // pred_check
      _
    $region23: #{_resample_impl.1} parent=1 // pred_check_branch
      %176 = sbr.rel (0) target = $region25
    $region24: #{_resample_impl.1} parent=1 // pred_region
      %178 = vsyncadd [#allocation4], 0
      %s179 = sshll.u32 [#allocation3], 4
      %s180 = int_to_ptr.vmem [resolvable:$true] %s179
      %s181 = sshll.u32 %s3, 4
      %s182 = int_to_ptr.hbm [resolvable:$true] %s181
      %187 = dma.vmem_to_hbm [thread:$0]  %s180, 384, %s182, [#allocation4], 128, 128, 8
    $region25: #{_resample_impl.1} parent=1 // pred_fallthru
      _
    // Predicated region
    $region26: #{_resample_impl.1} parent=1 // pred_check
      _
    $region27: #{_resample_impl.1} parent=1 // pred_check_branch
      %189 = sbr.rel (0) target = $region29
    $region28: #{_resample_impl.1} parent=1 // pred_region
      %191 = dma.done [#allocation4], 384
    $region29: #{_resample_impl.1} parent=1 // pred_fallthru
      _
    %192 = vsyncpa [#allocation4], 1

</llo_original>
